<compile_context>
chip_gen: v6e
topology: v6e:2x2x1
jax: 0.10.0
libtpu: 0.0.40
codegen_flags: <defaults>
</compile_context>

<pallas_src>
import functools
import math

import jax
import jax.numpy as jnp
from jax.experimental import pallas as pl
from jax.experimental.pallas import tpu as pltpu


# ----------------------------- Pallas kernel --------------------------------

def _conv_kernel(x_ref, w_ref, b_ref, o_ref, *, nb, kh, ho):
    """One grid step computes the conv for `nb` images.

    x_ref: (nb, H, W*Cin)     image rows, W and Cin flattened into the lane dim
    w_ref: (KH*W*Cin, Lout)   fused block-Toeplitz weights, Lout = Wo_pad*Cout_pad
    b_ref: (1, Lout)          bias replicated per (wo, co) output column (f32)
    o_ref: (nb, Ho, Lout)     conv output rows (lane-dense, Lout % 128 == 0)
    """
    # Build the fused-K LHS in VMEM (tiny KH-fold row duplication, never in HBM):
    # row r of image i is [x[i,r,:], x[i,r+1,:], ..., x[i,r+KH-1,:]] along lanes.
    per_image = []
    for i in range(nb):
        img = x_ref[i]                                           # (H, W*Cin)
        per_image.append(jnp.concatenate(
            [img[k:k + ho, :] for k in range(kh)], axis=-1))     # (Ho, KH*W*Cin)
    lhs = per_image[0] if nb == 1 else jnp.concatenate(per_image, axis=0)

    # Single MXU pass: (nb*Ho, KH*W*Cin) @ (KH*W*Cin, Lout) with f32 accumulate.
    acc = jnp.dot(lhs, w_ref[...], preferred_element_type=jnp.float32)
    acc = acc + b_ref[...]

    for i in range(nb):
        o_ref[i, :, :] = acc[i * ho:(i + 1) * ho, :].astype(o_ref.dtype)


# ------------------------------ helpers --------------------------------------

def _joint_lane_pad(wo, cout, lane=128):
    """Smallest (wo_pad, cout_pad) >= (wo, cout) with wo_pad*cout_pad % lane == 0."""
    best = None
    for cp in range(cout, cout + lane + 1):
        step = lane // math.gcd(cp, lane)
        wp = -(-wo // step) * step
        if best is None or wp * cp < best[0] * best[1]:
            best = (wp, cp)
    return best


def _pick_images_per_step(n, ho, target_rows=256):
    """Largest divisor Nb of N with Nb*Ho <= target_rows, keeping grid >= 2."""
    best = 1
    for nb in range(1, n + 1):
        if n % nb:
            continue
        if nb * ho > target_rows:
            break
        if n // nb >= 2 or n == 1:
            best = nb
    return best


# ------------------------------- wrapper -------------------------------------

def conv2d_pallas(x_nchw, weight, bias, *, compute_dtype=jnp.bfloat16):
    """Conv2d forward, stride=1, padding=0 (matches nn.Conv2d(3, 6, 3)).

    x_nchw: (N, Cin, H, W) float32
    weight: (Cout, Cin, KH, KW) float32 (PyTorch OIHW layout)
    bias:   (Cout,) float32
    returns (N, Cout, Ho, Wo) float32
    """
    N, Cin, H, W = x_nchw.shape
    Cout, Cin_w, KH, KW = weight.shape
    assert Cin_w == Cin
    Ho, Wo = H - KH + 1, W - KW + 1

    Wo_pad, Cout_pad = _joint_lane_pad(Wo, Cout, 128)
    Lout = Wo_pad * Cout_pad
    Ktot = KH * W * Cin
    Nb = _pick_images_per_step(N, Ho)

    # ---- glue: layout transforms (cheap, no im2col blowup in HBM) ----
    # NCHW -> NHWC -> (N, H, W*Cin): channels interleaved along the lane dim.
    x2 = jnp.transpose(x_nchw, (0, 2, 3, 1)).reshape(N, H, W * Cin)
    x2 = x2.astype(compute_dtype)

    # Fused block-Toeplitz weights (one-time, tiny):
    #   B[kh*(W*Cin) + (wo+kw)*Cin + ci, wo*Cout_pad + co] = weight[co, ci, kh, kw]
    wk = jnp.transpose(weight, (2, 3, 1, 0)).reshape(KH, KW * Cin, Cout)
    B = jnp.zeros((KH, W * Cin, Lout), jnp.float32)
    for wo in range(Wo):
        B = B.at[:, wo * Cin: wo * Cin + KW * Cin,
                 wo * Cout_pad: wo * Cout_pad + Cout].set(wk)
    B = B.reshape(Ktot, Lout).astype(compute_dtype)

    # Bias replicated across output spatial columns; pad channels with zeros.
    b_row = jnp.zeros((Wo_pad, Cout_pad), jnp.float32)
    b_row = b_row.at[:, :Cout].set(bias.astype(jnp.float32)[None, :])
    b_row = b_row.reshape(1, Lout)

    kernel = functools.partial(_conv_kernel, nb=Nb, kh=KH, ho=Ho)

    itemsize = jnp.dtype(compute_dtype).itemsize
    flops = 2 * N * Ho * Wo * Cout * Cin * KH * KW          # true conv FLOPs
    bytes_accessed = (x2.size * itemsize + B.size * itemsize
                      + b_row.size * 4 + N * Ho * Lout * 4)

    out = pl.pallas_call(
        kernel,
        out_shape=jax.ShapeDtypeStruct((N, Ho, Lout), jnp.float32),
        grid=(N // Nb,),
        in_specs=[
            pl.BlockSpec((Nb, H, W * Cin), lambda n: (n, 0, 0)),  # streamed images
            pl.BlockSpec((Ktot, Lout), lambda n: (0, 0)),         # resident weights
            pl.BlockSpec((1, Lout), lambda n: (0, 0)),            # resident bias
        ],
        out_specs=pl.BlockSpec((Nb, Ho, Lout), lambda n: (n, 0, 0)),
        compiler_params=pltpu.CompilerParams(
            dimension_semantics=("parallel",),
            vmem_limit_bytes=32 * 1024 * 1024,
        ),
        cost_estimate=pl.CostEstimate(
            flops=flops, transcendentals=0, bytes_accessed=bytes_accessed),
    )(x2, B, b_row)

    # ---- glue: drop spatial/channel padding, back to NCHW ----
    out = out.reshape(N, Ho, Wo_pad, Cout_pad)[:, :, :Wo, :Cout]
    return jnp.transpose(out, (0, 3, 1, 2))                      # (N, Cout, Ho, Wo)


# ------------------------------- driver --------------------------------------

if __name__ == "__main__":
    key = jax.random.PRNGKey(0)
    k_x, k_w, k_b = jax.random.split(key, 3)

    N, Cin, H, W = 4, 3, 16, 16
    Cout, KH, KW = 6, 3, 3

    x = jax.random.normal(k_x, (N, Cin, H, W), dtype=jnp.float32)

    # Deterministic parameter init (mimics PyTorch's U(-1/sqrt(fan_in), ...)).
    fan_in = Cin * KH * KW
    bound = 1.0 / math.sqrt(fan_in)
    weight = jax.random.uniform(k_w, (Cout, Cin, KH, KW),
                                minval=-bound, maxval=bound, dtype=jnp.float32)
    bias = jax.random.uniform(k_b, (Cout,),
                              minval=-bound, maxval=bound, dtype=jnp.float32)

    # Reference: XLA conv (NCHW, OIHW), f32.
    ref = jax.lax.conv_general_dilated(
        x, weight, window_strides=(1, 1), padding="VALID",
        dimension_numbers=("NCHW", "OIHW", "NCHW"),
    ) + bias.reshape(1, Cout, 1, 1)
    ref = jax.block_until_ready(ref)

    # f32 compute path: tight correctness check.
    conv_f32 = jax.jit(functools.partial(conv2d_pallas, compute_dtype=jnp.float32))
    out_f32 = jax.block_until_ready(conv_f32(x, weight, bias))
    assert out_f32.shape == (N, Cout, H - KH + 1, W - KW + 1), out_f32.shape
    assert jnp.allclose(out_f32, ref, atol=1e-4, rtol=1e-4), "f32 mismatch vs reference conv"

    # bf16 compute path (v6e/v7x fast path, f32 accumulate): looser tolerance.
    conv_bf16 = jax.jit(functools.partial(conv2d_pallas, compute_dtype=jnp.bfloat16))
    out_bf16 = jax.block_until_ready(conv_bf16(x, weight, bias))
    assert out_bf16.shape == ref.shape
    assert jnp.allclose(out_bf16, ref, atol=5e-2, rtol=5e-2), "bf16 mismatch vs reference conv"

    print("KERNEL_OK")
</pallas_src>

<mosaic_0001>
module attributes {stable_mosaic.version = 11 : i64} {
  func.func @_conv_kernel(%arg0: i32, %arg1: memref<2x16x48xf32, #tpu.memory_space<vmem>>, %arg2: memref<144x128xf32, #tpu.memory_space<vmem>>, %arg3: memref<1x128xf32, #tpu.memory_space<vmem>>, %arg4: memref<2x14x128xf32, #tpu.memory_space<vmem>>) attributes {dimension_semantics = [#tpu.dimension_semantics<parallel>], iteration_bounds = array<i64: 2>, scalar_prefetch = 0 : i64, scratch_operands = 0 : i64, tpu.core_type = #tpu.core_type<tc>, window_params = [{transform_indices = @transform_0, window_bounds = array<i64: 2, 16, 48>}, {pipeline_mode = #tpu.pipeline_mode<synchronous>, transform_indices = @transform_1, window_bounds = array<i64: 144, 128>}, {pipeline_mode = #tpu.pipeline_mode<synchronous>, transform_indices = @transform_2, window_bounds = array<i64: 1, 128>}, {transform_indices = @transform_3, window_bounds = array<i64: 2, 14, 128>}]} {
    %c0 = arith.constant 0 : index
    %c0_0 = arith.constant 0 : index
    %c0_1 = arith.constant 0 : index
    %0 = vector.load %arg1[%c0, %c0_0, %c0_1] : memref<2x16x48xf32, #tpu.memory_space<vmem>>, vector<1x16x48xf32>
    %1 = vector.shape_cast %0 : vector<1x16x48xf32> to vector<16x48xf32>
    %2 = vector.extract_strided_slice %1 {offsets = [0, 0], sizes = [14, 48], strides = [1, 1]} : vector<16x48xf32> to vector<14x48xf32>
    %3 = vector.extract_strided_slice %1 {offsets = [1, 0], sizes = [14, 48], strides = [1, 1]} : vector<16x48xf32> to vector<14x48xf32>
    %4 = vector.extract_strided_slice %1 {offsets = [2, 0], sizes = [14, 48], strides = [1, 1]} : vector<16x48xf32> to vector<14x48xf32>
    %5 = tpu.concatenate %2, %3, %4 in 1 : vector<14x48xf32>, vector<14x48xf32>, vector<14x48xf32> -> vector<14x144xf32>
    %c1 = arith.constant 1 : index
    %c0_2 = arith.constant 0 : index
    %c0_3 = arith.constant 0 : index
    %6 = vector.load %arg1[%c1, %c0_2, %c0_3] : memref<2x16x48xf32, #tpu.memory_space<vmem>>, vector<1x16x48xf32>
    %7 = vector.shape_cast %6 : vector<1x16x48xf32> to vector<16x48xf32>
    %8 = vector.extract_strided_slice %7 {offsets = [0, 0], sizes = [14, 48], strides = [1, 1]} : vector<16x48xf32> to vector<14x48xf32>
    %9 = vector.extract_strided_slice %7 {offsets = [1, 0], sizes = [14, 48], strides = [1, 1]} : vector<16x48xf32> to vector<14x48xf32>
    %10 = vector.extract_strided_slice %7 {offsets = [2, 0], sizes = [14, 48], strides = [1, 1]} : vector<16x48xf32> to vector<14x48xf32>
    %11 = tpu.concatenate %8, %9, %10 in 1 : vector<14x48xf32>, vector<14x48xf32>, vector<14x48xf32> -> vector<14x144xf32>
    %12 = tpu.concatenate %5, %11 in 0 : vector<14x144xf32>, vector<14x144xf32> -> vector<28x144xf32>
    %c0_4 = arith.constant 0 : index
    %c0_5 = arith.constant 0 : index
    %13 = vector.load %arg2[%c0_4, %c0_5] : memref<144x128xf32, #tpu.memory_space<vmem>>, vector<144x128xf32>
    %cst = arith.constant dense<0.000000e+00> : vector<28x128xf32>
    %14 = tpu.matmul %12, %13, %cst {dimension_numbers = #tpu.dot_dimension_numbers<[1], [0], [0], [1], [0, 0, 1, 1], [], []>} : vector<28x144xf32>, vector<144x128xf32>, vector<28x128xf32> -> vector<28x128xf32>
    %c0_6 = arith.constant 0 : index
    %c0_7 = arith.constant 0 : index
    %15 = vector.load %arg3[%c0_6, %c0_7] : memref<1x128xf32, #tpu.memory_space<vmem>>, vector<1x128xf32>
    %16 = vector.broadcast %15 : vector<1x128xf32> to vector<28x128xf32>
    %17 = arith.addf %14, %16 : vector<28x128xf32>
    %18 = vector.extract_strided_slice %17 {offsets = [0, 0], sizes = [14, 128], strides = [1, 1]} : vector<28x128xf32> to vector<14x128xf32>
    %c0_8 = arith.constant 0 : index
    %c0_9 = arith.constant 0 : index
    %c0_10 = arith.constant 0 : index
    %19 = vector.load %arg4[%c0_8, %c0_9, %c0_10] : memref<2x14x128xf32, #tpu.memory_space<vmem>>, vector<1x14x128xf32>
    %20 = vector.shape_cast %19 : vector<1x14x128xf32> to vector<14x128xf32>
    %21 = vector.shape_cast %18 : vector<14x128xf32> to vector<1x14x128xf32>
    tpu.vector_store %arg4[%c0_8, %c0_9, %c0_10], %21 {strides = array<i32>} : memref<2x14x128xf32, #tpu.memory_space<vmem>>, vector<1x14x128xf32>,
    %22 = vector.extract_strided_slice %17 {offsets = [14, 0], sizes = [14, 128], strides = [1, 1]} : vector<28x128xf32> to vector<14x128xf32>
    %c1_11 = arith.constant 1 : index
    %c0_12 = arith.constant 0 : index
    %c0_13 = arith.constant 0 : index
    %23 = vector.load %arg4[%c1_11, %c0_12, %c0_13] : memref<2x14x128xf32, #tpu.memory_space<vmem>>, vector<1x14x128xf32>
    %24 = vector.shape_cast %23 : vector<1x14x128xf32> to vector<14x128xf32>
    %25 = vector.shape_cast %22 : vector<14x128xf32> to vector<1x14x128xf32>
    tpu.vector_store %arg4[%c1_11, %c0_12, %c0_13], %25 {strides = array<i32>} : memref<2x14x128xf32, #tpu.memory_space<vmem>>, vector<1x14x128xf32>,
    return
  }
  func.func @transform_0(%arg0: i32) -> (i32, i32, i32) {
    %c0_i32 = arith.constant 0 : i32
    %c0_i32_0 = arith.constant 0 : i32
    %c0_i32_1 = arith.constant 0 : i32
    return %arg0, %c0_i32, %c0_i32_0 : i32, i32, i32
  }
  func.func @transform_1(%arg0: i32) -> (i32, i32) {
    %c0_i32 = arith.constant 0 : i32
    %c0_i32_0 = arith.constant 0 : i32
    %c0_i32_1 = arith.constant 0 : i32
    return %c0_i32, %c0_i32_0 : i32, i32
  }
  func.func @transform_2(%arg0: i32) -> (i32, i32) {
    %c0_i32 = arith.constant 0 : i32
    %c0_i32_0 = arith.constant 0 : i32
    %c0_i32_1 = arith.constant 0 : i32
    return %c0_i32, %c0_i32_0 : i32, i32
  }
  func.func @transform_3(%arg0: i32) -> (i32, i32, i32) {
    %c0_i32 = arith.constant 0 : i32
    %c0_i32_0 = arith.constant 0 : i32
    %c0_i32_1 = arith.constant 0 : i32
    return %arg0, %c0_i32, %c0_i32_0 : i32, i32, i32
  }
}

</mosaic_0001>

<llo_original>
// kernel: conv2d_pallas.1
$region0: #{conv2d_pallas.1}
  #allocation0 [shape = 'u32[]', space=smem, size = 0x4, offset = 0x4, fixed_abs, tag = 'smem constant byte address 0x4 - core index']
  #allocation1 [shape = 'u32[144,128]{1,0:T(1,128)}', space=vmem, size = 0x12000, scoped, tag = 'internal scratch']
  %s0 = inlined_call_operand.vmem [shape: f32[4,16,48], index: 0, kind: input, shape index: {}]
  %s1 = inlined_call_operand.vmem [shape: f32[144,128], index: 1, kind: input, shape index: {}]
  %s2 = inlined_call_operand.vmem [shape: f32[1,128], index: 2, kind: input, shape index: {}]
  %s3 = inlined_call_operand.vmem [shape: f32[4,14,128], index: 3, kind: output, shape index: {}]
  %s4 = sld [smem:[#allocation0]]
  $region45: #{conv2d_pallas.1} parent=0
    _
  %s6 = ssub.s32 1, %s4
  %s7 = scalar_select 0, %s6, %s4
  loop: start=0, step=1, limit=4
  $region2: #{conv2d_pallas.1} parent=0 // loop_pre_header
    _
  $region3: #{conv2d_pallas.1} parent=0 // loop_header
    %s9 = sphi 0, %s13
    %p10 = scmp.ge.s32.totalorder %s9, 4
    %s19 = sphi 0, %s21
    %s22 = sphi 0, %s19
    %s23 = sphi 0, %s22
    %s39 = sphi 0, %s23
    %s43 = sphi 0, %s43
    %s45 = sphi 0, %s43
    %s46 = sphi 0, %s45
    %s60 = sphi 0, %s46
    %s64 = sphi 0, %s64
    %s66 = sphi 0, %s64
    %s67 = sphi 0, %s66
    %s81 = sphi 0, %s67
    %s87 = sphi 0, %s89
    %s90 = sphi 0, %s87
    %s91 = sphi 0, %s90
    %s107 = sphi 0, %s91
  $region4: #{conv2d_pallas.1} parent=0 // loop_header_branch
    %12 = sbr.rel (%p10) target = $region8
  $region5: #{conv2d_pallas.1} parent=0 // loop_body
    %s14 = ssub.s32 %s9, 1
    %s15 = ssub.s32 %s9, 2
    %s16 = sadd.s32 %s9, 1
    %s17 = ssub.s32 %s9, %s16
    %p18 = scmp.eq.s32.totalorder %s17, 0
    %s20 = sadd.s32 %s19, 1
    %s21 = scalar_select %p18, %s19, %s20
    %p24 = pneg %p18
    %p25 = scmp.eq.s32.totalorder %s9, 1
    %p26 = por %p24, %p25
    %p27 = scmp.ne.s32.totalorder %s19, %s22
    %p28 = scmp.eq.s32.totalorder %s9, 0
    %p29 = por %p27, %p28
    %p30 = scmp.ne.s32.totalorder %s19, %s22
    %p31 = scmp.eq.s32.totalorder %s14, 1
    %p32 = por %p30, %p31
    %p33 = scmp.ne.s32.totalorder %s22, %s23
    %p34 = scmp.eq.s32.totalorder %s14, 0
    %p35 = por %p33, %p34
    %p36 = scmp.ne.s32.totalorder %s22, %s23
    %p37 = scmp.eq.s32.totalorder %s15, 1
    %p38 = por %p36, %p37
    %p40 = scmp.ne.s32.totalorder %s23, %s39
    %p41 = scmp.eq.s32.totalorder %s15, 0
    %p42 = por %p40, %p41
    %s44 = sadd.s32 %s43, 1
    %p47 = scmp.eq.s32.totalorder %s9, 1
    %p48 = scmp.ne.s32.totalorder %s43, %s45
    %p49 = scmp.eq.s32.totalorder %s9, 0
    %p50 = por %p48, %p49
    %p51 = scmp.ne.s32.totalorder %s43, %s45
    %p52 = scmp.eq.s32.totalorder %s14, 1
    %p53 = por %p51, %p52
    %p54 = scmp.ne.s32.totalorder %s45, %s46
    %p55 = scmp.eq.s32.totalorder %s14, 0
    %p56 = por %p54, %p55
    %p57 = scmp.ne.s32.totalorder %s45, %s46
    %p58 = scmp.eq.s32.totalorder %s15, 1
    %p59 = por %p57, %p58
    %p61 = scmp.ne.s32.totalorder %s46, %s60
    %p62 = scmp.eq.s32.totalorder %s15, 0
    %p63 = por %p61, %p62
    %s65 = sadd.s32 %s64, 1
    %p68 = scmp.eq.s32.totalorder %s9, 1
    %p69 = scmp.ne.s32.totalorder %s64, %s66
    %p70 = scmp.eq.s32.totalorder %s9, 0
    %p71 = por %p69, %p70
    %p72 = scmp.ne.s32.totalorder %s64, %s66
    %p73 = scmp.eq.s32.totalorder %s14, 1
    %p74 = por %p72, %p73
    %p75 = scmp.ne.s32.totalorder %s66, %s67
    %p76 = scmp.eq.s32.totalorder %s14, 0
    %p77 = por %p75, %p76
    %p78 = scmp.ne.s32.totalorder %s66, %s67
    %p79 = scmp.eq.s32.totalorder %s15, 1
    %p80 = por %p78, %p79
    %p82 = scmp.ne.s32.totalorder %s67, %s81
    %p83 = scmp.eq.s32.totalorder %s15, 0
    %p84 = por %p82, %p83
    %s85 = ssub.s32 %s9, %s16
    %p86 = scmp.eq.s32.totalorder %s85, 0
    %s88 = sadd.s32 %s87, 1
    %s89 = scalar_select %p86, %s87, %s88
    %p92 = pneg %p86
    %p93 = scmp.eq.s32.totalorder %s9, 1
    %p94 = por %p92, %p93
    %p95 = scmp.ne.s32.totalorder %s87, %s90
    %p96 = scmp.eq.s32.totalorder %s9, 0
    %p97 = por %p95, %p96
    %p98 = scmp.ne.s32.totalorder %s87, %s90
    %p99 = scmp.eq.s32.totalorder %s14, 1
    %p100 = por %p98, %p99
    %p101 = scmp.ne.s32.totalorder %s90, %s91
    %p102 = scmp.eq.s32.totalorder %s14, 0
    %p103 = por %p101, %p102
    %p104 = scmp.ne.s32.totalorder %s90, %s91
    %p105 = scmp.eq.s32.totalorder %s15, 1
    %p106 = por %p104, %p105
    %p108 = scmp.ne.s32.totalorder %s91, %s107
    %p109 = scmp.eq.s32.totalorder %s15, 0
    %p110 = por %p108, %p109
    %p111 = scmp.le.s32.totalorder 1, %s9
    %p112 = scmp.lt.s32.totalorder %s9, 3
    %p113 = pnand %p111, %p112
    %p114 = pneg %p113
    // Predicated region
    $region9: #{conv2d_pallas.1} parent=5 // pred_check
      _
    $region10: #{conv2d_pallas.1} parent=5 // pred_check_branch
      %116 = sbr.rel (%p113) target = $region12
    $region11: #{conv2d_pallas.1} parent=5 // pred_region
      %s117 = ssub.s32 %s9, 1
      // Predicated region
      $region13: #{conv2d_pallas.1} parent=11 // pred_check
        %p118 = pneg %p56
      $region14: #{conv2d_pallas.1} parent=11 // pred_check_branch
        %120 = sbr.rel (%p118) target = $region16
      $region15: #{conv2d_pallas.1} parent=11 // pred_region
        _
      $region16: #{conv2d_pallas.1} parent=11 // pred_fallthru
        _
      // Predicated region
      $region17: #{conv2d_pallas.1} parent=11 // pred_check
        %p121 = pneg %p77
      $region18: #{conv2d_pallas.1} parent=11 // pred_check_branch
        %123 = sbr.rel (%p121) target = $region20
      $region19: #{conv2d_pallas.1} parent=11 // pred_region
        _
      $region20: #{conv2d_pallas.1} parent=11 // pred_fallthru
        _
    $region12: #{conv2d_pallas.1} parent=5 // pred_fallthru
      _
    %p124 = scmp.lt.s32.totalorder %s9, 2
    // Predicated region
    $region21: #{conv2d_pallas.1} parent=5 // pred_check
      %p125 = pneg %p124
    $region22: #{conv2d_pallas.1} parent=5 // pred_check_branch
      %127 = sbr.rel (%p125) target = $region24
    $region23: #{conv2d_pallas.1} parent=5 // pred_region
      // Predicated region
      $region25: #{conv2d_pallas.1} parent=23 // pred_check
        %p128 = pneg %p29
      $region26: #{conv2d_pallas.1} parent=23 // pred_check_branch
        %130 = sbr.rel (%p128) target = $region28
      $region27: #{conv2d_pallas.1} parent=23 // pred_region
        %s131 = smul.u32 2, %s9
        %p132 = scmp.lt.s32.totalorder %s131, 3
        %s133 = scalar_select %p132, %s131, 3
        %s134 = smul.addr %s133, 2
        %s135 = smul.addr %s134, 8
        %s136 = scalar_lea.vmem %s0, %s135
        %s137 = smul.u32 2, %s9
      $region28: #{conv2d_pallas.1} parent=23 // pred_fallthru
        _
    $region24: #{conv2d_pallas.1} parent=5 // pred_fallthru
      _
    %p138 = scmp.le.s32.totalorder 1, %s9
    %p139 = scmp.lt.s32.totalorder %s9, 3
    %p140 = pnand %p138, %p139
    %p141 = pneg %p140
    // Predicated region
    $region29: #{conv2d_pallas.1} parent=5 // pred_check
      _
    $region30: #{conv2d_pallas.1} parent=5 // pred_check_branch
      %143 = sbr.rel (%p140) target = $region32
    $region31: #{conv2d_pallas.1} parent=5 // pred_region
      %s144 = ssub.s32 %s9, 1
      %s145 = smul.u32 2, %s14
      %p146 = scmp.lt.s32.totalorder %s145, 3
      %s147 = scalar_select %p146, %s145, 3
      %s148 = smul.addr %s147, 2
      %s149 = smul.addr %s148, 8
      %s150 = scalar_lea.vmem %s0, %s149
      %p151 = pneg %p35
      %p152 = pneg %p32
      %p153 = pneg %p56
      %p154 = pneg %p53
      %p155 = pneg %p77
      %p156 = pneg %p74
      %p157 = pneg %p103
      %p158 = pneg %p100
      %s159 = smul.u32 2, %s14
      %p160 = scmp.lt.s32.totalorder %s159, 3
      %s161 = scalar_select %p160, %s159, 3
      %s162 = smul.addr %s161, 2
      %s163 = smul.addr %s162, 8
      %s164 = scalar_lea.vmem %s3, %s163
      %s165 = smul.u32 2, %s14
      %p166 = scmp.lt.s32.totalorder %s165, 3
      %s167 = scalar_select %p166, %s165, 3
      %s168 = smul.addr %s167, 2
      %s169 = smul.addr %s168, 8
      %s170 = scalar_lea.vmem %s0, %s169
      %s171 = smul.u32 2, %s14
      %s172 = smul.u32 2, %s14
      %p173 = scmp.lt.s32.totalorder %s172, 3
      %s174 = scalar_select %p173, %s172, 3
      %s175 = smul.addr %s174, 2
      %s176 = smul.addr %s175, 8
      %s177 = scalar_lea.vmem %s3, %s176
      %s178 = smul.u32 2, %s14
      %v179 = vld [vmem:[%s170] sm:$0xff]
      %v180 = vld [vmem:[%s170 + $0x8] sm:$0xff]
      %vm183 = vcmask 1046528
      %v184 = vrot.slane %v179, 1
      %v185 = vrot.slane %v180, 1
      %v186 = vsel %vm183, %v184, %v185
      %187 = vrot.lane.b32.xlu0 %v186, 48
      %v188 = vpop.permute.xlu0 %187
      %189 = vrot.lane.b32.xlu0 %v185, 48
      %v190 = vpop.permute.xlu0 %189
      %vm193 = vcmask 1045504
      %v194 = vrot.slane %v179, 2
      %v195 = vrot.slane %v180, 2
      %v196 = vsel %vm193, %v194, %v195
      %197 = vrot.lane.b32.xlu0 %v196, 96
      %v198 = vpop.permute.xlu0 %197
      %199 = vrot.lane.b32.xlu0 %v195, 96
      %v200 = vpop.permute.xlu0 %199
      %vm203 = vcmask 392192
      %v204 = vsel %vm203, %v179, %v188
      %v205 = vsel %vm203, %v180, %v190
      %vm206 = vcmask 785408
      %v207 = vsel %vm206, %v204, %v198
      %v208 = vsel %vm206, %v205, %v200
      %s209 = scalar_lea.vmem %s170, 16
      %v210 = vld [vmem:[%s209] sm:$0xff]
      %v211 = vld [vmem:[%s209 + $0x8] sm:$0xff]
      %v214 = vrot.slane %v210, 1
      %v215 = vrot.slane %v211, 1
      %v216 = vsel %vm183, %v214, %v215
      %217 = vrot.lane.b32.xlu0 %v216, 48
      %v218 = vpop.permute.xlu0 %217
      %219 = vrot.lane.b32.xlu0 %v215, 48
      %v220 = vpop.permute.xlu0 %219
      %v223 = vrot.slane %v210, 2
      %v224 = vrot.slane %v211, 2
      %v225 = vsel %vm193, %v223, %v224
      %226 = vrot.lane.b32.xlu0 %v225, 96
      %v227 = vpop.permute.xlu0 %226
      %228 = vrot.lane.b32.xlu0 %v224, 96
      %v229 = vpop.permute.xlu0 %228
      %v232 = vsel %vm203, %v210, %v218
      %v233 = vsel %vm203, %v211, %v220
      %v234 = vsel %vm206, %v232, %v227
      %v235 = vsel %vm206, %v233, %v229
      %v238 = vrot.slane %v234, 2
      %v239 = vrot.slane %v227, 2
      %v240 = vrot.slane %v235, 2
      %v241 = vsel %vm193, %v238, %v240
      %v242 = vrot.slane %v229, 2
      %v243 = vsel %vm193, %v239, %v242
      %v248 = vsel %vm193, %v208, %v238
      %v249 = vsel %vm193, %v200, %v239
      %v250 = vld [vmem:[%s1] sm:$0xff]
      %v251 = vld [vmem:[%s1 + $0x8] sm:$0xff]
      %v252 = vld [vmem:[%s1 + $0x10] sm:$0xff]
      %v253 = vld [vmem:[%s1 + $0x18] sm:$0xff]
      %v254 = vld [vmem:[%s1 + $0x20] sm:$0xff]
      %v255 = vld [vmem:[%s1 + $0x28] sm:$0xff]
      %v256 = vld [vmem:[%s1 + $0x30] sm:$0xff]
      %v257 = vld [vmem:[%s1 + $0x38] sm:$0xff]
      %v258 = vld [vmem:[%s1 + $0x40] sm:$0xff]
      %v259 = vld [vmem:[%s1 + $0x48] sm:$0xff]
      %v260 = vld [vmem:[%s1 + $0x50] sm:$0xff]
      %v261 = vld [vmem:[%s1 + $0x58] sm:$0xff]
      %v262 = vld [vmem:[%s1 + $0x60] sm:$0xff]
      %v263 = vld [vmem:[%s1 + $0x68] sm:$0xff]
      %v264 = vld [vmem:[%s1 + $0x70] sm:$0xff]
      %v265 = vld [vmem:[%s1 + $0x78] sm:$0xff]
      %v266 = vld [vmem:[%s1 + $0x80] sm:$0xff]
      %v267 = vld [vmem:[%s1 + $0x88] sm:$0xff]
      %v268 = vld [vmem:[%s2] sm:$0x1]
      %v270 = vlaneseq
      %v271 = vshrl.u32 %v270, 7
      %v272 = vsub.s32 0, %v271
      %v273 = vrot.slane %v268, %v272
      %vm275 = vcmask 130048
      %v276 = vsel %vm275, %v198, 0
      %v279 = vsel %vm275, %v249, 0
      %v281 = vsel %vm275, %v243, 0
      %v283 = vsel %vm275, %v242, 0
      %285 = vmatprep.subr.mxu0 0.0
      %286 = vmatpush1.msra.mxu0 %v265
      %287 = vmatprep.subr.mxu0 0.0
      %288 = vmatpush1.msra.mxu0 %v264
      %289 = vmatprep.subr.mxu0 0.0
      %290 = vmatpush1.msra.mxu0 %v263
      %291 = vmatprep.subr.mxu0 0.0
      %292 = vmatpush1.msra.mxu0 %v262
      %293 = vmatprep.subr.mxu0 0.0
      %294 = vmatpush1.msra.mxu0 %v261
      %295 = vmatprep.subr.mxu0 0.0
      %296 = vmatpush1.msra.mxu0 %v260
      %297 = vmatprep.subr.mxu0 0.0
      %298 = vmatpush1.msra.mxu0 %v259
      %299 = vmatprep.subr.mxu0 0.0
      %300 = vmatpush1.msra.mxu0 %v258
      %301 = vmatprep.subr.mxu0 0.0
      %302 = vmatpush1.msra.mxu0 %v257
      %303 = vmatprep.subr.mxu0 0.0
      %304 = vmatpush1.msra.mxu0 %v256
      %305 = vmatprep.subr.mxu0 0.0
      %306 = vmatpush1.msra.mxu0 %v255
      %307 = vmatprep.subr.mxu0 0.0
      %308 = vmatpush1.msra.mxu0 %v254
      %309 = vmatprep.subr.mxu0 0.0
      %310 = vmatpush1.msra.mxu0 %v253
      %311 = vmatprep.subr.mxu0 0.0
      %312 = vmatpush1.msra.mxu0 %v252
      %313 = vmatprep.subr.mxu0 0.0
      %314 = vmatpush1.msra.mxu0 %v251
      %315 = vmatprep.subr.mxu0 0.0
      %316 = vmatpush1.msra.mxu0 %v250
      %317 = vmatprep.subr.mxu0 0.0
      %318 = vmatpush2.msra.mxu0 0.0
      %319 = vmatprep.subr.mxu0 0.0
      %320 = vmatpush2.msra.mxu0 0.0
      %321 = vmatprep.subr.mxu0 0.0
      %322 = vmatpush2.msra.mxu0 0.0
      %323 = vmatprep.subr.mxu0 0.0
      %324 = vmatpush2.msra.mxu0 0.0
      %325 = vmatprep.subr.mxu0 0.0
      %326 = vmatpush2.msra.mxu0 0.0
      %327 = vmatprep.subr.mxu0 0.0
      %328 = vmatpush2.msra.mxu0 0.0
      %329 = vmatprep.subr.mxu0 0.0
      %330 = vmatpush2.msra.mxu0 0.0
      %331 = vmatprep.subr.mxu0 0.0
      %332 = vmatpush2.msra.mxu0 0.0
      %333 = vmatprep.subr.mxu0 0.0
      %334 = vmatpush2.msra.mxu0 0.0
      %335 = vmatprep.subr.mxu0 0.0
      %336 = vmatpush2.msra.mxu0 0.0
      %337 = vmatprep.subr.mxu0 0.0
      %338 = vmatpush2.msra.mxu0 0.0
      %339 = vmatprep.subr.mxu0 0.0
      %340 = vmatpush2.msra.mxu0 0.0
      %341 = vmatprep.subr.mxu0 0.0
      %342 = vmatpush2.msra.mxu0 0.0
      %343 = vmatprep.subr.mxu0 0.0
      %344 = vmatpush2.msra.mxu0 0.0
      %345 = vmatprep.subr.mxu0 0.0
      %346 = vmatpush2.msra.mxu0 %v267
      %347 = vmatprep.subr.mxu0 0.0
      %348 = vmatpush2.msra.mxu0 %v266
      %349 = vmatprep.mubr.f32.mxu0 %v276
      %350 = vmatmul.mubr.f32.gmra.mxu0 %v207
      %v351 = vpop.f32.mrf.mxu0
      %v352 = vadd.f32 %v273, %v351
      %v353 = vpop.f32.mrf.mxu0
      %354 = vmatprep.mubr.f32.mxu0 %v279
      %355 = vmatmul.mubr.f32.gmra.mxu0 %v248
      %v356 = vpop.f32.mrf.mxu0
      %v357 = vadd.f32 %v273, %v356
      %v358 = vpop.f32.mrf.mxu0
      %359 = vmatprep.mubr.f32.mxu0 %v281
      %360 = vmatmul.mubr.f32.gmra.mxu0 %v241
      %v361 = vpop.f32.mrf.mxu0
      %v362 = vadd.f32 %v273, %v361
      %v363 = vpop.f32.mrf.mxu0
      %364 = vmatprep.mubr.f32.mxu0 %v283
      %365 = vmatmul.mubr.f32.gmra.mxu0 %v240
      %v366 = vpop.f32.mrf.mxu0
      %v367 = vadd.f32 %v273, %v366
      %v368 = vpop.f32.mrf.mxu0
      %369 = vdwg.mxu0
      %370 = vst [vmem:[%s177] sm:$0xff] %v352
      %371 = vst [vmem:[%s177 + $0x8] sm:$0x3f] %v357
      %s372 = scalar_lea.vmem %s177, 16
      %373 = vst [vmem:[%s372 - $0x6] sm:$0xc0] %v357
      %374 = vst [vmem:[%s372 + $0x2] sm:$0xff] %v362
      %375 = vst [vmem:[%s372 + $0xa] sm:$0xf] %v367
      %s376 = smul.u32 2, %s14
      %p377 = scmp.lt.s32.totalorder %s376, 3
      %s378 = scalar_select %p377, %s376, 3
      %s379 = smul.addr %s378, 2
      %s380 = smul.addr %s379, 8
      %s381 = scalar_lea.vmem %s3, %s380
      // Predicated region
      $region33: #{conv2d_pallas.1} parent=31 // pred_check
        %p382 = pneg %p100
      $region34: #{conv2d_pallas.1} parent=31 // pred_check_branch
        %384 = sbr.rel (%p382) target = $region36
      $region35: #{conv2d_pallas.1} parent=31 // pred_region
        %s385 = smul.u32 2, %s14
      $region36: #{conv2d_pallas.1} parent=31 // pred_fallthru
        _
    $region32: #{conv2d_pallas.1} parent=5 // pred_fallthru
      _
    %p386 = scmp.le.s32.totalorder 2, %s9
    // Predicated region
    $region37: #{conv2d_pallas.1} parent=5 // pred_check
      %p387 = pneg %p386
    $region38: #{conv2d_pallas.1} parent=5 // pred_check_branch
      %389 = sbr.rel (%p387) target = $region40
    $region39: #{conv2d_pallas.1} parent=5 // pred_region
      %s390 = ssub.s32 %s9, 2
      // Predicated region
      $region41: #{conv2d_pallas.1} parent=39 // pred_check
        %p391 = pneg %p106
      $region42: #{conv2d_pallas.1} parent=39 // pred_check_branch
        %393 = sbr.rel (%p391) target = $region44
      $region43: #{conv2d_pallas.1} parent=39 // pred_region
        %s394 = smul.u32 2, %s15
        %p395 = scmp.lt.s32.totalorder %s394, 3
        %s396 = scalar_select %p395, %s394, 3
        %s397 = smul.addr %s396, 2
        %s398 = smul.addr %s397, 8
        %s399 = scalar_lea.vmem %s3, %s398
      $region44: #{conv2d_pallas.1} parent=39 // pred_fallthru
        _
    $region40: #{conv2d_pallas.1} parent=5 // pred_fallthru
      _
  $region6: #{conv2d_pallas.1} parent=0 // loop_footer
    %s13 = sadd.s32 1, %s9
  $region7: #{conv2d_pallas.1} parent=0 // loop_footer_branch
    %8 = sbr.rel target = $region3
  $region8: #{conv2d_pallas.1} parent=0 // loop_exit
    _

</llo_original>
